<compile_context>
chip_gen: v5e
topology: v5e:2x2
jax: 0.10.0
libtpu: 0.0.40
codegen_flags: <defaults>
</compile_context>

<pallas_src>
import functools

import jax
import jax.numpy as jnp
from jax.experimental import pallas as pl
from jax.experimental.pallas import tpu as pltpu

EPS = 1e-5              # GraphNorm default eps
LANE = 128              # lane width; feature / node padding granularity
TILE_ROWS = 512         # A_hat row tile (output rows) in the tiled path
TILE_K = 512            # A_hat contraction tile in the tiled path (power of 2)
FUSED_N_MAX = 2048      # padded node count handled by the single fused kernel
RESIDENT_N_MAX = 32768  # padded node count up to which X / H1 stay VMEM-resident


# ----------------------------- Pallas kernels ------------------------------ #
def fused_gcnex_kernel(a_ref, x_ref, w1_ref, b1_ref, gamma_ref, beta_ref,
                       alpha_ref, w2_ref, b2_ref, o_ref, *, n_valid):
    """Entire forward in one kernel (small graphs; everything VMEM-resident)."""
    a = a_ref[...]
    # conv1: H = A_hat @ (X @ W1) + b1
    xw = jnp.dot(x_ref[...], w1_ref[...], preferred_element_type=jnp.float32)
    h = jnp.dot(a, xw.astype(jnp.bfloat16),
                preferred_element_type=jnp.float32) + b1_ref[...]
    # GraphNorm (exact two-pass; padded node rows masked out of statistics)
    row = jax.lax.broadcasted_iota(jnp.int32, h.shape, 0)
    valid = row < n_valid
    mean = jnp.sum(jnp.where(valid, h, 0.0), axis=0, keepdims=True) / n_valid
    c = h - alpha_ref[...] * mean
    var = jnp.sum(jnp.where(valid, c * c, 0.0), axis=0, keepdims=True) / n_valid
    g = gamma_ref[...] * c * jax.lax.rsqrt(var + EPS) + beta_ref[...]
    # ReLU; dropout is identity in eval mode.
    # TODO(synk): training-mode dropout needs pltpu.prng_seed/prng_random_bits.
    g = jnp.maximum(g, 0.0)
    # conv2: out = A_hat @ (G @ W2) + b2
    gw = jnp.dot(g.astype(jnp.bfloat16), w2_ref[...],
                 preferred_element_type=jnp.float32)
    o_ref[...] = jnp.dot(a, gw.astype(jnp.bfloat16),
                         preferred_element_type=jnp.float32) + b2_ref[...]


def conv1_stats_kernel(a_ref, x_ref, w1_ref, b1_ref,
                       h_ref, s_ref, ss_ref, acc_ref,
                       *, tile_r, tile_k, n_valid, x_resident):
    """acc[i] += A[i,k] @ (X[k] @ W1); last k: H1[i] = acc + b1 (bf16) plus
    per-row-tile GraphNorm partial sums (masked to valid node rows)."""
    # NOTE: grid indices hoisted OUT of pl.when bodies (lowering requirement).
    i = pl.program_id(0)
    k = pl.program_id(1)
    last_k = pl.num_programs(1) - 1

    @pl.when(k == 0)
    def _():
        acc_ref[...] = jnp.zeros_like(acc_ref)

    if x_resident:                                  # full (n_p, F) resident block
        xk = x_ref[pl.ds(k * tile_k, tile_k), :]
    else:                                           # streamed (tile_k, F) block
        xk = x_ref[...]
    xw = jnp.dot(xk, w1_ref[...], preferred_element_type=jnp.float32)
    acc_ref[...] += jnp.dot(a_ref[...], xw.astype(jnp.bfloat16),
                            preferred_element_type=jnp.float32)

    @pl.when(k == last_k)
    def _():
        h = acc_ref[...] + b1_ref[...]
        h_ref[...] = h.astype(h_ref.dtype)          # bf16 writeback
        row = i * tile_r + jax.lax.broadcasted_iota(jnp.int32, h.shape, 0)
        hv = jnp.where(row < n_valid, h, 0.0)
        s = jnp.sum(hv, axis=0, keepdims=True)
        ss = jnp.sum(hv * hv, axis=0, keepdims=True)
        # replicate over 8 sublanes -> full (8,128)-aligned unmasked stores
        s_ref[...] = jnp.broadcast_to(s, s_ref.shape)
        ss_ref[...] = jnp.broadcast_to(ss, ss_ref.shape)


def norm_relu_conv2_kernel(a_ref, h_ref, scale_ref, shift_ref, w2_ref, b2_ref,
                           o_ref, acc_ref, *, tile_k, h_resident):
    """acc[i] += A[i,k] @ (relu(H1[k]*scale + shift) @ W2); out = acc + b2."""
    k = pl.program_id(1)
    last_k = pl.num_programs(1) - 1

    @pl.when(k == 0)
    def _():
        acc_ref[...] = jnp.zeros_like(acc_ref)

    if h_resident:
        hk = h_ref[pl.ds(k * tile_k, tile_k), :]
    else:
        hk = h_ref[...]
    # GraphNorm via precomputed scale/shift, ReLU in f32; dropout = eval identity.
    g = jnp.maximum(hk.astype(jnp.float32) * scale_ref[...] + shift_ref[...], 0.0)
    gw = jnp.dot(g.astype(jnp.bfloat16), w2_ref[...],
                 preferred_element_type=jnp.float32)
    acc_ref[...] += jnp.dot(a_ref[...], gw.astype(jnp.bfloat16),
                            preferred_element_type=jnp.float32)

    @pl.when(k == last_k)
    def _():
        o_ref[...] = acc_ref[...] + b2_ref[...]


# ------------------------------ JAX glue ----------------------------------- #
def _round_up(x, m):
    return (x + m - 1) // m * m


def _pad2(x, rows, cols):
    return jnp.pad(x, ((0, rows - x.shape[0]), (0, cols - x.shape[1])))


def build_norm_adj(edge_index, num_nodes):
    """Dense D^{-1/2} (A + I) D^{-1/2}, matching PyG GCNConv gcn_norm.

    Build ONCE per graph and reuse across forward calls.
    TODO(synk): for large sparse graphs, replace the dense A_hat with a
    scalar-prefetch gather kernel instead of an O(N^2) dense matrix.
    """
    src, dst = edge_index[0], edge_index[1]
    loop = jnp.arange(num_nodes, dtype=edge_index.dtype)
    src = jnp.concatenate([src, loop])
    dst = jnp.concatenate([dst, loop])
    deg = jnp.zeros((num_nodes,), jnp.float32).at[dst].add(1.0)
    dinv = jnp.where(deg > 0, 1.0 / jnp.sqrt(deg), 0.0)
    norm = dinv[src] * dinv[dst]
    # aggregation: out[i] = sum_{j -> i} norm_ij * x_j  =>  A_hat[dst, src]
    return jnp.zeros((num_nodes, num_nodes), jnp.float32).at[dst, src].add(norm)


def _pad_params(params, fin_p, fout_p):
    return dict(
        w1=_pad2(params["w1"], fin_p, fin_p).astype(jnp.bfloat16),
        w2=_pad2(params["w2"], fin_p, fout_p).astype(jnp.bfloat16),
        b1=_pad2(params["b1"], 1, fin_p),
        b2=_pad2(params["b2"], 1, fout_p),
        gamma=_pad2(params["gamma"], 1, fin_p),
        beta=_pad2(params["beta"], 1, fin_p),
        alpha=_pad2(params["alpha"], 1, fin_p),
    )


def _fused_forward(x, a_hat, params, n, fin, fout):
    """Single-kernel path for small graphs (n_p <= FUSED_N_MAX)."""
    n_p = _round_up(n, LANE)
    fin_p = _round_up(fin, LANE)
    fout_p = _round_up(fout, LANE)
    pp = _pad_params(params, fin_p, fout_p)

    a_p = _pad2(a_hat, n_p, n_p).astype(jnp.bfloat16)
    x_p = _pad2(x, n_p, fin_p).astype(jnp.bfloat16)

    flops = (2 * n_p * fin_p * fin_p + 2 * n_p * n_p * fin_p
             + 2 * n_p * fin_p * fout_p + 2 * n_p * n_p * fout_p)
    bytes_acc = (2 * n_p * n_p + 2 * n_p * fin_p + 2 * fin_p * (fin_p + fout_p)
                 + 4 * n_p * fout_p)
    out = pl.pallas_call(
        functools.partial(fused_gcnex_kernel, n_valid=n),
        out_shape=jax.ShapeDtypeStruct((n_p, fout_p), jnp.float32),
        cost_estimate=pl.CostEstimate(flops=flops, transcendentals=fin_p,
                                      bytes_accessed=bytes_acc),
    )(a_p, x_p, pp["w1"], pp["b1"], pp["gamma"], pp["beta"], pp["alpha"],
      pp["w2"], pp["b2"])
    return out[:n, :fout]


def _tiled_forward(x, a_hat, params, n, fin, fout):
    """Two-kernel pipelined path for large graphs."""
    fin_p = _round_up(fin, LANE)
    fout_p = _round_up(fout, LANE)
    pp = _pad_params(params, fin_p, fout_p)

    tile_r = min(TILE_ROWS, _round_up(n, LANE))
    tile_k = min(TILE_K, _round_up(n, LANE))
    n_p = _round_up(n, max(tile_r, tile_k))   # tiles are powers of two >= 128
    n_i = n_p // tile_r                       # row tiles (parallel -> megacore)
    n_k = n_p // tile_k                       # contraction tiles (arbitrary)
    resident = n_p <= RESIDENT_N_MAX          # keep X / H1 VMEM-resident

    a_p = _pad2(a_hat, n_p, n_p).astype(jnp.bfloat16)
    x_p = _pad2(x, n_p, fin_p).astype(jnp.bfloat16)

    cp = pltpu.CompilerParams(dimension_semantics=("parallel", "arbitrary"))

    if resident:
        x_spec = pl.BlockSpec((n_p, fin_p), lambda i, k: (0, 0))   # DMA'd once
        x_read = 2 * n_p * fin_p
    else:
        x_spec = pl.BlockSpec((tile_k, fin_p), lambda i, k: (k, 0))
        x_read = 2 * n_p * fin_p * n_i

    # ---- kernel 1: H1 = A_hat @ (X @ W1) + b1, plus GraphNorm partials ----- #
    h1, s_part, ss_part = pl.pallas_call(
        functools.partial(conv1_stats_kernel, tile_r=tile_r, tile_k=tile_k,
                          n_valid=n, x_resident=resident),
        out_shape=(jax.ShapeDtypeStruct((n_p, fin_p), jnp.bfloat16),
                   jax.ShapeDtypeStruct((8 * n_i, fin_p), jnp.float32),
                   jax.ShapeDtypeStruct((8 * n_i, fin_p), jnp.float32)),
        grid_spec=pltpu.PrefetchScalarGridSpec(
            num_scalar_prefetch=0, grid=(n_i, n_k),
            in_specs=[pl.BlockSpec((tile_r, tile_k), lambda i, k: (i, k)),
                      x_spec,
                      pl.BlockSpec((fin_p, fin_p), lambda i, k: (0, 0)),
                      pl.BlockSpec((1, fin_p), lambda i, k: (0, 0))],
            out_specs=(pl.BlockSpec((tile_r, fin_p), lambda i, k: (i, 0)),
                       pl.BlockSpec((8, fin_p), lambda i, k: (i, 0)),
                       pl.BlockSpec((8, fin_p), lambda i, k: (i, 0))),
            scratch_shapes=[pltpu.VMEM((tile_r, fin_p), jnp.float32)]),
        compiler_params=cp,
        cost_estimate=pl.CostEstimate(
            flops=2 * n_p * n_p * fin_p + 2 * n_p * fin_p * fin_p * n_i,
            transcendentals=0,
            bytes_accessed=(2 * n_p * n_p + x_read + 2 * fin_p * fin_p
                            + 2 * n_p * fin_p + 2 * 4 * 8 * n_i * fin_p)),
    )(a_p, x_p, pp["w1"], pp["b1"])

    # ---- finish GraphNorm stats -> per-feature scale / shift ([1, F]) ------ #
    s = s_part.reshape(n_i, 8, fin_p)[:, 0, :].sum(axis=0, keepdims=True)
    ss = ss_part.reshape(n_i, 8, fin_p)[:, 0, :].sum(axis=0, keepdims=True)
    mean = s / n
    msq = ss / n
    # E[(h - a*mean)^2] = E[h^2] - (2a - a^2) * mean^2; clamp against
    # catastrophic cancellation when |mean| >> std.
    var = jnp.maximum(
        msq - (2.0 * pp["alpha"] - pp["alpha"] * pp["alpha"]) * mean * mean, 0.0)
    scale = pp["gamma"] * jax.lax.rsqrt(var + EPS)
    shift = pp["beta"] - scale * pp["alpha"] * mean

    if resident:
        h_spec = pl.BlockSpec((n_p, fin_p), lambda i, k: (0, 0))   # DMA'd once
        h_read = 2 * n_p * fin_p
    else:
        h_spec = pl.BlockSpec((tile_k, fin_p), lambda i, k: (k, 0))
        h_read = 2 * n_p * fin_p * n_i

    # ---- kernel 2: out = A_hat @ (relu(H1*scale + shift) @ W2) + b2 -------- #
    out = pl.pallas_call(
        functools.partial(norm_relu_conv2_kernel, tile_k=tile_k,
                          h_resident=resident),
        out_shape=jax.ShapeDtypeStruct((n_p, fout_p), jnp.float32),
        grid_spec=pltpu.PrefetchScalarGridSpec(
            num_scalar_prefetch=0, grid=(n_i, n_k),
            in_specs=[pl.BlockSpec((tile_r, tile_k), lambda i, k: (i, k)),
                      h_spec,
                      pl.BlockSpec((1, fin_p), lambda i, k: (0, 0)),
                      pl.BlockSpec((1, fin_p), lambda i, k: (0, 0)),
                      pl.BlockSpec((fin_p, fout_p), lambda i, k: (0, 0)),
                      pl.BlockSpec((1, fout_p), lambda i, k: (0, 0))],
            out_specs=pl.BlockSpec((tile_r, fout_p), lambda i, k: (i, 0)),
            scratch_shapes=[pltpu.VMEM((tile_r, fout_p), jnp.float32)]),
        compiler_params=cp,
        cost_estimate=pl.CostEstimate(
            flops=2 * n_p * n_p * fout_p + 2 * n_p * fin_p * fout_p * n_i,
            transcendentals=0,
            bytes_accessed=(2 * n_p * n_p + h_read + 2 * fin_p * fout_p
                            + 4 * n_p * fout_p)),
    )(a_p, h1, scale, shift, pp["w2"], pp["b2"])

    return out[:n, :fout]


def gcnex_forward(x, a_hat, params, *, force_tiled=False):
    n, fin = x.shape
    fout = params["w2"].shape[1]
    if not force_tiled and _round_up(n, LANE) <= FUSED_N_MAX:
        return _fused_forward(x, a_hat, params, n, fin, fout)
    return _tiled_forward(x, a_hat, params, n, fin, fout)


def gcnex_reference(x, a_hat, params):
    """Plain-JAX f32 reference mirroring the PyTorch module (eval mode)."""
    h = a_hat @ (x @ params["w1"]) + params["b1"]
    mean = h.mean(axis=0, keepdims=True)
    c = h - params["alpha"] * mean
    var = (c * c).mean(axis=0, keepdims=True)
    h = params["gamma"] * c * jax.lax.rsqrt(var + EPS) + params["beta"]
    h = jnp.maximum(h, 0.0)
    return a_hat @ (h @ params["w2"]) + params["b2"]


def init_params(key, num_in_features, num_out_features):
    k1, k2 = jax.random.split(key)
    # Glorot-uniform-ish deterministic init for GCNConv weights; PyG inits bias=0.
    lim1 = (6.0 / (num_in_features + num_in_features)) ** 0.5
    lim2 = (6.0 / (num_in_features + num_out_features)) ** 0.5
    return {
        "w1": jax.random.uniform(k1, (num_in_features, num_in_features),
                                 jnp.float32, -lim1, lim1),
        "b1": jnp.zeros((1, num_in_features), jnp.float32),
        # GraphNorm: weight=1, bias=0, mean_scale(alpha)=1
        "gamma": jnp.ones((1, num_in_features), jnp.float32),
        "beta": jnp.zeros((1, num_in_features), jnp.float32),
        "alpha": jnp.ones((1, num_in_features), jnp.float32),
        "w2": jax.random.uniform(k2, (num_in_features, num_out_features),
                                 jnp.float32, -lim2, lim2),
        "b2": jnp.zeros((1, num_out_features), jnp.float32),
    }


def _ring_graph(num_nodes):
    idx = jnp.arange(num_nodes, dtype=jnp.int32)
    nxt = (idx + 1) % num_nodes
    return jnp.stack([jnp.concatenate([idx, nxt]),
                      jnp.concatenate([nxt, idx])], axis=0)


if __name__ == "__main__":
    key = jax.random.PRNGKey(0)
    k_x1, k_x2, k_p = jax.random.split(key, 3)

    num_in_features = 8
    num_out_features = 4
    params = init_params(k_p, num_in_features, num_out_features)

    fwd = jax.jit(gcnex_forward, static_argnames=("force_tiled",))

    # --- 1) small graph (N=16): exercises the fully fused single-kernel path --
    n_small = 16
    x_s = jax.random.normal(k_x1, (n_small, num_in_features), jnp.float32)
    a_hat_s = build_norm_adj(_ring_graph(n_small), n_small)  # build once, reuse

    out_s = jax.block_until_ready(fwd(x_s, a_hat_s, params))
    assert out_s.shape == (n_small, num_out_features)
    assert bool(jnp.all(jnp.isfinite(out_s)))
    ref_s = gcnex_reference(x_s, a_hat_s, params)
    err_s = float(jnp.max(jnp.abs(out_s - ref_s)))
    assert err_s < 1e-1, f"fused path max abs error vs reference: {err_s}"

    # --- 2) larger graph (N=700 -> padded 1024, grid (2,2)): tiled 2-kernel path
    n_big = 700
    x_b = jax.random.normal(k_x2, (n_big, num_in_features), jnp.float32)
    a_hat_b = build_norm_adj(_ring_graph(n_big), n_big)

    out_b = jax.block_until_ready(fwd(x_b, a_hat_b, params, force_tiled=True))
    assert out_b.shape == (n_big, num_out_features)
    assert bool(jnp.all(jnp.isfinite(out_b)))
    ref_b = gcnex_reference(x_b, a_hat_b, params)
    err_b = float(jnp.max(jnp.abs(out_b - ref_b)))
    assert err_b < 1e-1, f"tiled path max abs error vs reference: {err_b}"

    print("KERNEL_OK")
</pallas_src>

<mosaic_0001>
module attributes {stable_mosaic.version = 11 : i64} {
  func.func @fused_gcnex_kernel(%arg0: memref<128x128xbf16, #tpu.memory_space<vmem>>, %arg1: memref<128x128xbf16, #tpu.memory_space<vmem>>, %arg2: memref<128x128xbf16, #tpu.memory_space<vmem>>, %arg3: memref<1x128xf32, #tpu.memory_space<vmem>>, %arg4: memref<1x128xf32, #tpu.memory_space<vmem>>, %arg5: memref<1x128xf32, #tpu.memory_space<vmem>>, %arg6: memref<1x128xf32, #tpu.memory_space<vmem>>, %arg7: memref<128x128xbf16, #tpu.memory_space<vmem>>, %arg8: memref<1x128xf32, #tpu.memory_space<vmem>>, %arg9: memref<128x128xf32, #tpu.memory_space<vmem>>) attributes {dimension_semantics = [], scalar_prefetch = 0 : i64, scratch_operands = 0 : i64, tpu.core_type = #tpu.core_type<tc>} {
    %c0 = arith.constant 0 : index
    %c0_0 = arith.constant 0 : index
    %0 = vector.load %arg0[%c0, %c0_0] : memref<128x128xbf16, #tpu.memory_space<vmem>>, vector<128x128xbf16>
    %c0_1 = arith.constant 0 : index
    %c0_2 = arith.constant 0 : index
    %1 = vector.load %arg1[%c0_1, %c0_2] : memref<128x128xbf16, #tpu.memory_space<vmem>>, vector<128x128xbf16>
    %c0_3 = arith.constant 0 : index
    %c0_4 = arith.constant 0 : index
    %2 = vector.load %arg2[%c0_3, %c0_4] : memref<128x128xbf16, #tpu.memory_space<vmem>>, vector<128x128xbf16>
    %cst = arith.constant dense<0.000000e+00> : vector<128x128xf32>
    %3 = tpu.matmul %1, %2, %cst {dimension_numbers = #tpu.dot_dimension_numbers<[1], [0], [0], [1], [0, 0, 1, 1], [], []>} : vector<128x128xbf16>, vector<128x128xbf16>, vector<128x128xf32> -> vector<128x128xf32>
    %4 = arith.truncf %3 : vector<128x128xf32> to vector<128x128xbf16>
    %cst_5 = arith.constant dense<0.000000e+00> : vector<128x128xf32>
    %5 = tpu.matmul %0, %4, %cst_5 {dimension_numbers = #tpu.dot_dimension_numbers<[1], [0], [0], [1], [0, 0, 1, 1], [], []>} : vector<128x128xbf16>, vector<128x128xbf16>, vector<128x128xf32> -> vector<128x128xf32>
    %c0_6 = arith.constant 0 : index
    %c0_7 = arith.constant 0 : index
    %6 = vector.load %arg3[%c0_6, %c0_7] : memref<1x128xf32, #tpu.memory_space<vmem>>, vector<1x128xf32>
    %7 = vector.broadcast %6 : vector<1x128xf32> to vector<128x128xf32>
    %8 = arith.addf %5, %7 : vector<128x128xf32>
    %9 = tpu.iota {dimensions = array<i32: 0>} : vector<128x128xi32>
    %c16_i32 = arith.constant 16 : i32
    %10 = vector.broadcast %c16_i32 : i32 to vector<128x128xi32>
    %11 = arith.cmpi slt, %9, %10 : vector<128x128xi32>
    %cst_8 = arith.constant 0.000000e+00 : f32
    %12 = vector.broadcast %cst_8 : f32 to vector<128x128xf32>
    %13 = arith.select %11, %8, %12 : vector<128x128xi1>, vector<128x128xf32>
    %cst_9 = arith.constant dense<0.000000e+00> : vector<128xf32>
    %14 = vector.multi_reduction <add>, %13, %cst_9 [0] : vector<128x128xf32> to vector<128xf32>
    %15 = vector.shape_cast %14 : vector<128xf32> to vector<1x128xf32>
    %cst_10 = arith.constant 1.600000e+01 : f32
    %16 = vector.broadcast %cst_10 : f32 to vector<1x128xf32>
    %17 = arith.divf %15, %16 : vector<1x128xf32>
    %c0_11 = arith.constant 0 : index
    %c0_12 = arith.constant 0 : index
    %18 = vector.load %arg6[%c0_11, %c0_12] : memref<1x128xf32, #tpu.memory_space<vmem>>, vector<1x128xf32>
    %19 = arith.mulf %18, %17 : vector<1x128xf32>
    %20 = vector.broadcast %19 : vector<1x128xf32> to vector<128x128xf32>
    %21 = arith.subf %8, %20 : vector<128x128xf32>
    %22 = arith.mulf %21, %21 : vector<128x128xf32>
    %cst_13 = arith.constant 0.000000e+00 : f32
    %23 = vector.broadcast %cst_13 : f32 to vector<128x128xf32>
    %24 = arith.select %11, %22, %23 : vector<128x128xi1>, vector<128x128xf32>
    %cst_14 = arith.constant dense<0.000000e+00> : vector<128xf32>
    %25 = vector.multi_reduction <add>, %24, %cst_14 [0] : vector<128x128xf32> to vector<128xf32>
    %26 = vector.shape_cast %25 : vector<128xf32> to vector<1x128xf32>
    %cst_15 = arith.constant 1.600000e+01 : f32
    %27 = vector.broadcast %cst_15 : f32 to vector<1x128xf32>
    %28 = arith.divf %26, %27 : vector<1x128xf32>
    %c0_16 = arith.constant 0 : index
    %c0_17 = arith.constant 0 : index
    %29 = vector.load %arg4[%c0_16, %c0_17] : memref<1x128xf32, #tpu.memory_space<vmem>>, vector<1x128xf32>
    %30 = vector.broadcast %29 : vector<1x128xf32> to vector<128x128xf32>
    %31 = arith.mulf %30, %21 : vector<128x128xf32>
    %cst_18 = arith.constant 9.99999974E-6 : f32
    %32 = vector.broadcast %cst_18 : f32 to vector<1x128xf32>
    %33 = arith.addf %28, %32 : vector<1x128xf32>
    %34 = math.rsqrt %33 : vector<1x128xf32>
    %35 = vector.broadcast %34 : vector<1x128xf32> to vector<128x128xf32>
    %36 = arith.mulf %31, %35 : vector<128x128xf32>
    %c0_19 = arith.constant 0 : index
    %c0_20 = arith.constant 0 : index
    %37 = vector.load %arg5[%c0_19, %c0_20] : memref<1x128xf32, #tpu.memory_space<vmem>>, vector<1x128xf32>
    %38 = vector.broadcast %37 : vector<1x128xf32> to vector<128x128xf32>
    %39 = arith.addf %36, %38 : vector<128x128xf32>
    %cst_21 = arith.constant 0.000000e+00 : f32
    %40 = vector.broadcast %cst_21 : f32 to vector<128x128xf32>
    %41 = arith.maximumf %39, %40 : vector<128x128xf32>
    %42 = arith.truncf %41 : vector<128x128xf32> to vector<128x128xbf16>
    %c0_22 = arith.constant 0 : index
    %c0_23 = arith.constant 0 : index
    %43 = vector.load %arg7[%c0_22, %c0_23] : memref<128x128xbf16, #tpu.memory_space<vmem>>, vector<128x128xbf16>
    %cst_24 = arith.constant dense<0.000000e+00> : vector<128x128xf32>
    %44 = tpu.matmul %42, %43, %cst_24 {dimension_numbers = #tpu.dot_dimension_numbers<[1], [0], [0], [1], [0, 0, 1, 1], [], []>} : vector<128x128xbf16>, vector<128x128xbf16>, vector<128x128xf32> -> vector<128x128xf32>
    %45 = arith.truncf %44 : vector<128x128xf32> to vector<128x128xbf16>
    %cst_25 = arith.constant dense<0.000000e+00> : vector<128x128xf32>
    %46 = tpu.matmul %0, %45, %cst_25 {dimension_numbers = #tpu.dot_dimension_numbers<[1], [0], [0], [1], [0, 0, 1, 1], [], []>} : vector<128x128xbf16>, vector<128x128xbf16>, vector<128x128xf32> -> vector<128x128xf32>
    %c0_26 = arith.constant 0 : index
    %c0_27 = arith.constant 0 : index
    %47 = vector.load %arg8[%c0_26, %c0_27] : memref<1x128xf32, #tpu.memory_space<vmem>>, vector<1x128xf32>
    %48 = vector.broadcast %47 : vector<1x128xf32> to vector<128x128xf32>
    %49 = arith.addf %46, %48 : vector<128x128xf32>
    %c0_28 = arith.constant 0 : index
    %c0_29 = arith.constant 0 : index
    %50 = vector.load %arg9[%c0_28, %c0_29] : memref<128x128xf32, #tpu.memory_space<vmem>>, vector<128x128xf32>
    tpu.vector_store %arg9[%c0_28, %c0_29], %49 {strides = array<i32>} : memref<128x128xf32, #tpu.memory_space<vmem>>, vector<128x128xf32>,
    return
  }
}

</mosaic_0001>

<llo_original>
// kernel: gcnex_forward.1
$region0: #{gcnex_forward.1}
  #allocation0 [shape = 'u32[]', space=smem, size = 0x4, offset = 0x4, fixed_abs, tag = 'smem constant byte address 0x4 - core index']
  #allocation1 [shape = 'u32[72,128]{1,0:T(1,128)}', space=vmem, size = 0x9000, scoped, tag = 'internal scratch']
  %s0 = inlined_call_operand.vmem [shape: bf16[128,128], index: 0, kind: input, shape index: {}]
  %s1 = inlined_call_operand.vmem [shape: bf16[128,128], index: 1, kind: input, shape index: {}]
  %s2 = inlined_call_operand.vmem [shape: bf16[128,128], index: 2, kind: input, shape index: {}]
  %s3 = inlined_call_operand.vmem [shape: f32[1,128], index: 3, kind: input, shape index: {}]
  %s4 = inlined_call_operand.vmem [shape: f32[1,128], index: 4, kind: input, shape index: {}]
  %s5 = inlined_call_operand.vmem [shape: f32[1,128], index: 5, kind: input, shape index: {}]
  %s6 = inlined_call_operand.vmem [shape: f32[1,128], index: 6, kind: input, shape index: {}]
  %s7 = inlined_call_operand.vmem [shape: bf16[128,128], index: 7, kind: input, shape index: {}]
  %s8 = inlined_call_operand.vmem [shape: f32[1,128], index: 8, kind: input, shape index: {}]
  %s9 = inlined_call_operand.vmem [shape: f32[128,128], index: 9, kind: output, shape index: {}]
  %s10 = sld [smem:[#allocation0]]
  $region46: #{gcnex_forward.1} parent=0
    _
  %s12 = ssub.s32 1, %s10
  %s13 = scalar_select 0, %s12, %s10
  // Predicated region
  $region2: #{gcnex_forward.1} parent=0 // pred_check
    _
  $region3: #{gcnex_forward.1} parent=0 // pred_check_branch
    %15 = sbr.rel (0) target = $region5
  $region4: #{gcnex_forward.1} parent=0 // pred_region
    _
  $region5: #{gcnex_forward.1} parent=0 // pred_fallthru
    _
  // Predicated region
  $region6: #{gcnex_forward.1} parent=0 // pred_check
    _
  $region7: #{gcnex_forward.1} parent=0 // pred_check_branch
    %17 = sbr.rel (0) target = $region9
  $region8: #{gcnex_forward.1} parent=0 // pred_region
    _
  $region9: #{gcnex_forward.1} parent=0 // pred_fallthru
    _
  // Predicated region
  $region10: #{gcnex_forward.1} parent=0 // pred_check
    _
  $region11: #{gcnex_forward.1} parent=0 // pred_check_branch
    %19 = sbr.rel (0) target = $region13
  $region12: #{gcnex_forward.1} parent=0 // pred_region
    _
  $region13: #{gcnex_forward.1} parent=0 // pred_fallthru
    _
  // Predicated region
  $region14: #{gcnex_forward.1} parent=0 // pred_check
    _
  $region15: #{gcnex_forward.1} parent=0 // pred_check_branch
    %21 = sbr.rel (0) target = $region17
  $region16: #{gcnex_forward.1} parent=0 // pred_region
    _
  $region17: #{gcnex_forward.1} parent=0 // pred_fallthru
    _
  // Predicated region
  $region18: #{gcnex_forward.1} parent=0 // pred_check
    _
  $region19: #{gcnex_forward.1} parent=0 // pred_check_branch
    %23 = sbr.rel (0) target = $region21
  $region20: #{gcnex_forward.1} parent=0 // pred_region
    _
  $region21: #{gcnex_forward.1} parent=0 // pred_fallthru
    _
  // Predicated region
  $region22: #{gcnex_forward.1} parent=0 // pred_check
    _
  $region23: #{gcnex_forward.1} parent=0 // pred_check_branch
    %25 = sbr.rel (0) target = $region25
  $region24: #{gcnex_forward.1} parent=0 // pred_region
    _
  $region25: #{gcnex_forward.1} parent=0 // pred_fallthru
    _
  // Predicated region
  $region26: #{gcnex_forward.1} parent=0 // pred_check
    _
  $region27: #{gcnex_forward.1} parent=0 // pred_check_branch
    %27 = sbr.rel (0) target = $region29
  $region28: #{gcnex_forward.1} parent=0 // pred_region
    _
  $region29: #{gcnex_forward.1} parent=0 // pred_fallthru
    _
  // Predicated region
  $region30: #{gcnex_forward.1} parent=0 // pred_check
    _
  $region31: #{gcnex_forward.1} parent=0 // pred_check_branch
    %29 = sbr.rel (0) target = $region33
  $region32: #{gcnex_forward.1} parent=0 // pred_region
    _
  $region33: #{gcnex_forward.1} parent=0 // pred_fallthru
    _
  // Predicated region
  $region34: #{gcnex_forward.1} parent=0 // pred_check
    _
  $region35: #{gcnex_forward.1} parent=0 // pred_check_branch
    %31 = sbr.rel (0) target = $region37
  $region36: #{gcnex_forward.1} parent=0 // pred_region
    _
  $region37: #{gcnex_forward.1} parent=0 // pred_fallthru
    _
  %v32 = vld [vmem:[%s0] sm:$0xf]
  %v33 = vld [vmem:[%s0 + $0x4] sm:$0xf]
  %v34 = vld [vmem:[%s0 + $0x8] sm:$0xf]
  %v35 = vld [vmem:[%s0 + $0xc] sm:$0xf]
  %v36 = vld [vmem:[%s0 + $0x10] sm:$0xf]
  %v37 = vld [vmem:[%s0 + $0x14] sm:$0xf]
  %v38 = vld [vmem:[%s0 + $0x18] sm:$0xf]
  %v39 = vld [vmem:[%s0 + $0x1c] sm:$0xf]
  %v40 = vld [vmem:[%s0 + $0x20] sm:$0xf]
  %v41 = vld [vmem:[%s0 + $0x24] sm:$0xf]
  %v42 = vld [vmem:[%s0 + $0x28] sm:$0xf]
  %v43 = vld [vmem:[%s0 + $0x2c] sm:$0xf]
  %v44 = vld [vmem:[%s0 + $0x30] sm:$0xf]
  %v45 = vld [vmem:[%s0 + $0x34] sm:$0xf]
  %v46 = vld [vmem:[%s0 + $0x38] sm:$0xf]
  %v47 = vld [vmem:[%s0 + $0x3c] sm:$0xf]
  %v48 = vld [vmem:[%s1] sm:$0xf]
  %v49 = vld [vmem:[%s1 + $0x4] sm:$0xf]
  %v50 = vld [vmem:[%s1 + $0x8] sm:$0xf]
  %v51 = vld [vmem:[%s1 + $0xc] sm:$0xf]
  %v52 = vld [vmem:[%s1 + $0x10] sm:$0xf]
  %v53 = vld [vmem:[%s1 + $0x14] sm:$0xf]
  %v54 = vld [vmem:[%s1 + $0x18] sm:$0xf]
  %v55 = vld [vmem:[%s1 + $0x1c] sm:$0xf]
  %v56 = vld [vmem:[%s1 + $0x20] sm:$0xf]
  %v57 = vld [vmem:[%s1 + $0x24] sm:$0xf]
  %v58 = vld [vmem:[%s1 + $0x28] sm:$0xf]
  %v59 = vld [vmem:[%s1 + $0x2c] sm:$0xf]
  %v60 = vld [vmem:[%s1 + $0x30] sm:$0xf]
  %v61 = vld [vmem:[%s1 + $0x34] sm:$0xf]
  %v62 = vld [vmem:[%s1 + $0x38] sm:$0xf]
  %v63 = vld [vmem:[%s1 + $0x3c] sm:$0xf]
  %v64 = vld [vmem:[%s2] sm:$0xf]
  %v65 = vld [vmem:[%s2 + $0x4] sm:$0xf]
  %v66 = vld [vmem:[%s2 + $0x8] sm:$0xf]
  %v67 = vld [vmem:[%s2 + $0xc] sm:$0xf]
  %v68 = vld [vmem:[%s2 + $0x10] sm:$0xf]
  %v69 = vld [vmem:[%s2 + $0x14] sm:$0xf]
  %v70 = vld [vmem:[%s2 + $0x18] sm:$0xf]
  %v71 = vld [vmem:[%s2 + $0x1c] sm:$0xf]
  %v72 = vld [vmem:[%s2 + $0x20] sm:$0xf]
  %v73 = vld [vmem:[%s2 + $0x24] sm:$0xf]
  %v74 = vld [vmem:[%s2 + $0x28] sm:$0xf]
  %v75 = vld [vmem:[%s2 + $0x2c] sm:$0xf]
  %v76 = vld [vmem:[%s2 + $0x30] sm:$0xf]
  %v77 = vld [vmem:[%s2 + $0x34] sm:$0xf]
  %v78 = vld [vmem:[%s2 + $0x38] sm:$0xf]
  %v79 = vld [vmem:[%s2 + $0x3c] sm:$0xf]
  %v96 = vunpack.c.l.b16 %v48
  %v97 = vunpack.c.l.b16 %v49
  %v98 = vunpack.c.l.b16 %v50
  %v99 = vunpack.c.l.b16 %v51
  %v100 = vunpack.c.l.b16 %v52
  %v101 = vunpack.c.l.b16 %v53
  %v102 = vunpack.c.l.b16 %v54
  %v103 = vunpack.c.l.b16 %v55
  %v104 = vunpack.c.l.b16 %v56
  %v105 = vunpack.c.l.b16 %v57
  %v106 = vunpack.c.l.b16 %v58
  %v107 = vunpack.c.l.b16 %v59
  %v108 = vunpack.c.l.b16 %v60
  %v109 = vunpack.c.l.b16 %v61
  %v110 = vunpack.c.l.b16 %v62
  %v111 = vunpack.c.l.b16 %v63
  %v112 = vpack.c.b16 %v97, %v96
  %v113 = vpack.c.b16 %v99, %v98
  %v114 = vpack.c.b16 %v101, %v100
  %v115 = vpack.c.b16 %v103, %v102
  %v116 = vpack.c.b16 %v105, %v104
  %v117 = vpack.c.b16 %v107, %v106
  %v118 = vpack.c.b16 %v109, %v108
  %v119 = vpack.c.b16 %v111, %v110
  %v144 = vunpack.c.l.b16 %v64
  %v145 = vunpack.c.l.b16 %v65
  %v146 = vunpack.c.l.b16 %v66
  %v147 = vunpack.c.l.b16 %v67
  %v148 = vunpack.c.l.b16 %v68
  %v149 = vunpack.c.l.b16 %v69
  %v150 = vunpack.c.l.b16 %v70
  %v151 = vunpack.c.l.b16 %v71
  %v152 = vunpack.c.l.b16 %v72
  %v153 = vunpack.c.l.b16 %v73
  %v154 = vunpack.c.l.b16 %v74
  %v155 = vunpack.c.l.b16 %v75
  %v156 = vunpack.c.l.b16 %v76
  %v157 = vunpack.c.l.b16 %v77
  %v158 = vunpack.c.l.b16 %v78
  %v159 = vunpack.c.l.b16 %v79
  %v160 = vpack.c.b16 %v145, %v144
  %v161 = vpack.c.b16 %v147, %v146
  %v162 = vpack.c.b16 %v149, %v148
  %v163 = vpack.c.b16 %v151, %v150
  %v164 = vpack.c.b16 %v153, %v152
  %v165 = vpack.c.b16 %v155, %v154
  %v166 = vpack.c.b16 %v157, %v156
  %v167 = vpack.c.b16 %v159, %v158
  %176 = vmatpush.bf16.msra.mxu0 %v167
  %177 = vmatpush.bf16.msra.mxu0 %v166
  %178 = vmatpush.bf16.msra.mxu0 %v165
  %179 = vmatpush.bf16.msra.mxu0 %v164
  %180 = vmatpush.bf16.msra.mxu0 %v163
  %181 = vmatpush.bf16.msra.mxu0 %v162
  %182 = vmatpush.bf16.msra.mxu0 %v161
  %183 = vmatpush.bf16.msra.mxu0 %v160
  %184 = vmatmul.bf16.gmra.mxu0 %v112
  %v185 = vpop.f32.mrf.mxu0
  %v186 = vadd.f32 0.0, %v185
  %v187 = vpop.f32.mrf.mxu0
  %v188 = vadd.f32 0.0, %v187
  %189 = vmatmul.bf16.gmra.mxu0 %v113
  %v190 = vpop.f32.mrf.mxu0
  %v191 = vadd.f32 0.0, %v190
  %v192 = vpop.f32.mrf.mxu0
  %v193 = vadd.f32 0.0, %v192
  %194 = vmatmul.bf16.gmra.mxu0 %v114
  %v195 = vpop.f32.mrf.mxu0
  %v196 = vadd.f32 0.0, %v195
  %v197 = vpop.f32.mrf.mxu0
  %v198 = vadd.f32 0.0, %v197
  %199 = vmatmul.bf16.gmra.mxu0 %v115
  %v200 = vpop.f32.mrf.mxu0
  %v201 = vadd.f32 0.0, %v200
  %v202 = vpop.f32.mrf.mxu0
  %v203 = vadd.f32 0.0, %v202
  %204 = vmatmul.bf16.gmra.mxu0 %v116
  %v205 = vpop.f32.mrf.mxu0
  %v206 = vadd.f32 0.0, %v205
  %v207 = vpop.f32.mrf.mxu0
  %v208 = vadd.f32 0.0, %v207
  %209 = vmatmul.bf16.gmra.mxu0 %v117
  %v210 = vpop.f32.mrf.mxu0
  %v211 = vadd.f32 0.0, %v210
  %v212 = vpop.f32.mrf.mxu0
  %v213 = vadd.f32 0.0, %v212
  %214 = vmatmul.bf16.gmra.mxu0 %v118
  %v215 = vpop.f32.mrf.mxu0
  %v216 = vadd.f32 0.0, %v215
  %v217 = vpop.f32.mrf.mxu0
  %v218 = vadd.f32 0.0, %v217
  %219 = vmatmul.bf16.gmra.mxu0 %v119
  %v220 = vpop.f32.mrf.mxu0
  %v221 = vadd.f32 0.0, %v220
  %v222 = vpop.f32.mrf.mxu0
  %v223 = vadd.f32 0.0, %v222
  %224 = vdwg.mxu0
  %v225 = vpack.c.bf16 %v188, %v186
  %v226 = vpack.c.bf16 %v193, %v191
  %v227 = vpack.c.bf16 %v198, %v196
  %v228 = vpack.c.bf16 %v203, %v201
  %v229 = vpack.c.bf16 %v208, %v206
  %v230 = vpack.c.bf16 %v213, %v211
  %v231 = vpack.c.bf16 %v218, %v216
  %v232 = vpack.c.bf16 %v223, %v221
  %v233 = vld [vmem:[%s3] sm:$0x1]
  %v235 = vperm.slane %v233, 0
  %v253 = vunpack.c.l.b16 %v32
  %v254 = vunpack.c.l.b16 %v33
  %v255 = vunpack.c.l.b16 %v34
  %v256 = vunpack.c.l.b16 %v35
  %v257 = vunpack.c.l.b16 %v36
  %v258 = vunpack.c.l.b16 %v37
  %v259 = vunpack.c.l.b16 %v38
  %v260 = vunpack.c.l.b16 %v39
  %v261 = vunpack.c.l.b16 %v40
  %v262 = vunpack.c.l.b16 %v41
  %v263 = vunpack.c.l.b16 %v42
  %v264 = vunpack.c.l.b16 %v43
  %v265 = vunpack.c.l.b16 %v44
  %v266 = vunpack.c.l.b16 %v45
  %v267 = vunpack.c.l.b16 %v46
  %v268 = vunpack.c.l.b16 %v47
  %v269 = vpack.c.b16 %v254, %v253
  %v270 = vpack.c.b16 %v256, %v255
  %v271 = vpack.c.b16 %v258, %v257
  %v272 = vpack.c.b16 %v260, %v259
  %v273 = vpack.c.b16 %v262, %v261
  %v274 = vpack.c.b16 %v264, %v263
  %v275 = vpack.c.b16 %v266, %v265
  %v276 = vpack.c.b16 %v268, %v267
  %285 = vmatpush.bf16.msra.mxu0 %v232
  %286 = vmatpush.bf16.msra.mxu0 %v231
  %287 = vmatpush.bf16.msra.mxu0 %v230
  %288 = vmatpush.bf16.msra.mxu0 %v229
  %289 = vmatpush.bf16.msra.mxu0 %v228
  %290 = vmatpush.bf16.msra.mxu0 %v227
  %291 = vmatpush.bf16.msra.mxu0 %v226
  %292 = vmatpush.bf16.msra.mxu0 %v225
  %293 = vmatmul.bf16.gmra.mxu0 %v269
  %v294 = vpop.f32.mrf.mxu0
  %v295 = vadd.f32 %v235, %v294
  %v296 = vpop.f32.mrf.mxu0
  %v297 = vadd.f32 %v235, %v296
  %298 = vmatmul.bf16.gmra.mxu0 %v270
  %v299 = vpop.f32.mrf.mxu0
  %v300 = vadd.f32 %v235, %v299
  %v301 = vpop.f32.mrf.mxu0
  %v302 = vadd.f32 %v235, %v301
  %303 = vmatmul.bf16.gmra.mxu0 %v271
  %v304 = vpop.f32.mrf.mxu0
  %v305 = vadd.f32 %v235, %v304
  %v306 = vpop.f32.mrf.mxu0
  %v307 = vadd.f32 %v235, %v306
  %308 = vmatmul.bf16.gmra.mxu0 %v272
  %v309 = vpop.f32.mrf.mxu0
  %v310 = vadd.f32 %v235, %v309
  %v311 = vpop.f32.mrf.mxu0
  %v312 = vadd.f32 %v235, %v311
  %313 = vmatmul.bf16.gmra.mxu0 %v273
  %v314 = vpop.f32.mrf.mxu0
  %v315 = vadd.f32 %v235, %v314
  %v316 = vpop.f32.mrf.mxu0
  %v317 = vadd.f32 %v235, %v316
  %318 = vmatmul.bf16.gmra.mxu0 %v274
  %v319 = vpop.f32.mrf.mxu0
  %v320 = vadd.f32 %v235, %v319
  %v321 = vpop.f32.mrf.mxu0
  %v322 = vadd.f32 %v235, %v321
  %323 = vmatmul.bf16.gmra.mxu0 %v275
  %v324 = vpop.f32.mrf.mxu0
  %v325 = vadd.f32 %v235, %v324
  %v326 = vpop.f32.mrf.mxu0
  %v327 = vadd.f32 %v235, %v326
  %328 = vmatmul.bf16.gmra.mxu0 %v276
  %v329 = vpop.f32.mrf.mxu0
  %v330 = vadd.f32 %v235, %v329
  %v331 = vpop.f32.mrf.mxu0
  %v332 = vadd.f32 %v235, %v331
  %333 = vdwg.mxu0
  %v334 = vlaneseq
  %v335 = vshrl.u32 %v334, 7
  %v336 = vadd.s32 %v335, 8
  %v337 = vadd.s32 %v335, 16
  %v338 = vadd.s32 %v335, 24
  %v339 = vadd.s32 %v335, 32
  %v340 = vadd.s32 %v335, 40
  %v341 = vadd.s32 %v335, 48
  %v342 = vadd.s32 %v335, 56
  %v343 = vadd.s32 %v335, 64
  %v344 = vadd.s32 %v335, 72
  %v345 = vadd.s32 %v335, 80
  %v346 = vadd.s32 %v335, 88
  %v347 = vadd.s32 %v335, 96
  %v348 = vadd.s32 %v335, 104
  %v349 = vadd.s32 %v335, 112
  %v350 = vadd.s32 %v335, 120
  %vm351 = vcmp.lt.s32.totalorder %v335, 16
  %vm352 = vcmp.lt.s32.totalorder %v336, 16
  %vm353 = vcmp.lt.s32.totalorder %v337, 16
  %vm354 = vcmp.lt.s32.totalorder %v338, 16
  %vm355 = vcmp.lt.s32.totalorder %v339, 16
  %vm356 = vcmp.lt.s32.totalorder %v340, 16
  %vm357 = vcmp.lt.s32.totalorder %v341, 16
  %vm358 = vcmp.lt.s32.totalorder %v342, 16
  %vm359 = vcmp.lt.s32.totalorder %v343, 16
  %vm360 = vcmp.lt.s32.totalorder %v344, 16
  %vm361 = vcmp.lt.s32.totalorder %v345, 16
  %vm362 = vcmp.lt.s32.totalorder %v346, 16
  %vm363 = vcmp.lt.s32.totalorder %v347, 16
  %vm364 = vcmp.lt.s32.totalorder %v348, 16
  %vm365 = vcmp.lt.s32.totalorder %v349, 16
  %vm366 = vcmp.lt.s32.totalorder %v350, 16
  %v367 = vsel %vm351, %v295, 0.0
  %v368 = vsel %vm352, %v297, 0.0
  %v369 = vsel %vm353, %v300, 0.0
  %v370 = vsel %vm354, %v302, 0.0
  %v371 = vsel %vm355, %v305, 0.0
  %v372 = vsel %vm356, %v307, 0.0
  %v373 = vsel %vm357, %v310, 0.0
  %v374 = vsel %vm358, %v312, 0.0
  %v375 = vsel %vm359, %v315, 0.0
  %v376 = vsel %vm360, %v317, 0.0
  %v377 = vsel %vm361, %v320, 0.0
  %v378 = vsel %vm362, %v322, 0.0
  %v379 = vsel %vm363, %v325, 0.0
  %v380 = vsel %vm364, %v327, 0.0
  %v381 = vsel %vm365, %v330, 0.0
  %v382 = vsel %vm366, %v332, 0.0
  %v383 = vadd.f32 %v367, %v368
  %v384 = vadd.f32 %v383, %v369
  %v385 = vadd.f32 %v384, %v370
  %v386 = vadd.f32 %v385, %v371
  %v387 = vadd.f32 %v386, %v372
  %v388 = vadd.f32 %v387, %v373
  %v389 = vadd.f32 %v388, %v374
  %v390 = vadd.f32 %v389, %v375
  %v391 = vadd.f32 %v390, %v376
  %v392 = vadd.f32 %v391, %v377
  %v393 = vadd.f32 %v392, %v378
  %v394 = vadd.f32 %v393, %v379
  %v395 = vadd.f32 %v394, %v380
  %v396 = vadd.f32 %v395, %v381
  %v397 = vadd.f32 %v396, %v382
  %v398 = vrot.slane %v397, 4
  %v399 = vadd.f32 %v397, %v398
  %v400 = vrot.slane %v399, 2
  %v401 = vadd.f32 %v399, %v400
  %v402 = vrot.slane %v401, 1
  %v403 = vadd.f32 %v401, %v402
  %v404 = vrcp.pop 16.0
  %v405 = vmul.f32 16.0, %v404
  %v406 = vsub.f32 1.0, %v405
  %v407 = vmul.f32 %v404, %v406
  %v408 = vadd.f32 %v404, %v407
  %vm409 = vweird.f32 %v404
  %v410 = vsel %vm409, %v404, %v408
  %v411 = vmul.f32 %v403, %v410
  %v412 = vld [vmem:[%s6] sm:$0x1]
  %v413 = vmul.f32 %v412, %v411
  %v415 = vperm.slane %v413, 0
  %v417 = vsub.f32 %v295, %v415
  %v418 = vsub.f32 %v297, %v415
  %v419 = vsub.f32 %v300, %v415
  %v420 = vsub.f32 %v302, %v415
  %v421 = vsub.f32 %v305, %v415
  %v422 = vsub.f32 %v307, %v415
  %v423 = vsub.f32 %v310, %v415
  %v424 = vsub.f32 %v312, %v415
  %v425 = vsub.f32 %v315, %v415
  %v426 = vsub.f32 %v317, %v415
  %v427 = vsub.f32 %v320, %v415
  %v428 = vsub.f32 %v322, %v415
  %v429 = vsub.f32 %v325, %v415
  %v430 = vsub.f32 %v327, %v415
  %v431 = vsub.f32 %v330, %v415
  %v432 = vsub.f32 %v332, %v415
  %v433 = vmul.f32 %v417, %v417
  %v434 = vmul.f32 %v418, %v418
  %v435 = vmul.f32 %v419, %v419
  %v436 = vmul.f32 %v420, %v420
  %v437 = vmul.f32 %v421, %v421
  %v438 = vmul.f32 %v422, %v422
  %v439 = vmul.f32 %v423, %v423
  %v440 = vmul.f32 %v424, %v424
  %v441 = vmul.f32 %v425, %v425
  %v442 = vmul.f32 %v426, %v426
  %v443 = vmul.f32 %v427, %v427
  %v444 = vmul.f32 %v428, %v428
  %v445 = vmul.f32 %v429, %v429
  %v446 = vmul.f32 %v430, %v430
  %v447 = vmul.f32 %v431, %v431
  %v448 = vmul.f32 %v432, %v432
  %v449 = vsel %vm351, %v433, 0.0
  %v450 = vsel %vm352, %v434, 0.0
  %v451 = vsel %vm353, %v435, 0.0
  %v452 = vsel %vm354, %v436, 0.0
  %v453 = vsel %vm355, %v437, 0.0
  %v454 = vsel %vm356, %v438, 0.0
  %v455 = vsel %vm357, %v439, 0.0
  %v456 = vsel %vm358, %v440, 0.0
  %v457 = vsel %vm359, %v441, 0.0
  %v458 = vsel %vm360, %v442, 0.0
  %v459 = vsel %vm361, %v443, 0.0
  %v460 = vsel %vm362, %v444, 0.0
  %v461 = vsel %vm363, %v445, 0.0
  %v462 = vsel %vm364, %v446, 0.0
  %v463 = vsel %vm365, %v447, 0.0
  %v464 = vsel %vm366, %v448, 0.0
  %v465 = vadd.f32 %v449, %v450
  %v466 = vadd.f32 %v465, %v451
  %v467 = vadd.f32 %v466, %v452
  %v468 = vadd.f32 %v467, %v453
  %v469 = vadd.f32 %v468, %v454
  %v470 = vadd.f32 %v469, %v455
  %v471 = vadd.f32 %v470, %v456
  %v472 = vadd.f32 %v471, %v457
  %v473 = vadd.f32 %v472, %v458
  %v474 = vadd.f32 %v473, %v459
  %v475 = vadd.f32 %v474, %v460
  %v476 = vadd.f32 %v475, %v461
  %v477 = vadd.f32 %v476, %v462
  %v478 = vadd.f32 %v477, %v463
  %v479 = vadd.f32 %v478, %v464
  %v480 = vrot.slane %v479, 4
  %v481 = vadd.f32 %v479, %v480
  %v482 = vrot.slane %v481, 2
  %v483 = vadd.f32 %v481, %v482
  %v484 = vrot.slane %v483, 1
  %v485 = vadd.f32 %v483, %v484
  %v486 = vmul.f32 %v485, %v410
  %v487 = vld [vmem:[%s4] sm:$0x1]
  %v489 = vperm.slane %v487, 0
  %v491 = vmul.f32 %v489, %v417
  %v492 = vmul.f32 %v489, %v418
  %v493 = vmul.f32 %v489, %v419
  %v494 = vmul.f32 %v489, %v420
  %v495 = vmul.f32 %v489, %v421
  %v496 = vmul.f32 %v489, %v422
  %v497 = vmul.f32 %v489, %v423
  %v498 = vmul.f32 %v489, %v424
  %v499 = vmul.f32 %v489, %v425
  %v500 = vmul.f32 %v489, %v426
  %v501 = vmul.f32 %v489, %v427
  %v502 = vmul.f32 %v489, %v428
  %v503 = vmul.f32 %v489, %v429
  %v504 = vmul.f32 %v489, %v430
  %v505 = vmul.f32 %v489, %v431
  %v506 = vmul.f32 %v489, %v432
  %v507 = vadd.f32 %v486, 1e-05
  %v508 = vrsqrt.pop %v507
  %v509 = vmul.f32 %v508, %v507
  %v510 = vmul.f32 %v509, %v508
  %v511 = vmul.f32 0.5, %v510
  %v512 = vsub.f32 1.5, %v511
  %v513 = vmul.f32 %v508, %v512
  %vm514 = vweird.f32 %v507
  %vm515 = vweird.f32 %v508
  %vm516 = vmor %vm514, %vm515
  %v517 = vsel %vm516, %v508, %v513
  %v518 = vmul.f32 %v491, %v517
  %v519 = vmul.f32 %v492, %v517
  %v520 = vmul.f32 %v493, %v517
  %v521 = vmul.f32 %v494, %v517
  %v522 = vmul.f32 %v495, %v517
  %v523 = vmul.f32 %v496, %v517
  %v524 = vmul.f32 %v497, %v517
  %v525 = vmul.f32 %v498, %v517
  %v526 = vmul.f32 %v499, %v517
  %v527 = vmul.f32 %v500, %v517
  %v528 = vmul.f32 %v501, %v517
  %v529 = vmul.f32 %v502, %v517
  %v530 = vmul.f32 %v503, %v517
  %v531 = vmul.f32 %v504, %v517
  %v532 = vmul.f32 %v505, %v517
  %v533 = vmul.f32 %v506, %v517
  %v534 = vld [vmem:[%s5] sm:$0x1]
  %v536 = vperm.slane %v534, 0
  %v538 = vadd.f32 %v518, %v536
  %v539 = vadd.f32 %v519, %v536
  %v540 = vadd.f32 %v520, %v536
  %v541 = vadd.f32 %v521, %v536
  %v542 = vadd.f32 %v522, %v536
  %v543 = vadd.f32 %v523, %v536
  %v544 = vadd.f32 %v524, %v536
  %v545 = vadd.f32 %v525, %v536
  %v546 = vadd.f32 %v526, %v536
  %v547 = vadd.f32 %v527, %v536
  %v548 = vadd.f32 %v528, %v536
  %v549 = vadd.f32 %v529, %v536
  %v550 = vadd.f32 %v530, %v536
  %v551 = vadd.f32 %v531, %v536
  %v552 = vadd.f32 %v532, %v536
  %v553 = vadd.f32 %v533, %v536
  %v554 = vmax.f32 %v538, 0.0
  %v555 = vmax.f32 %v539, 0.0
  %v556 = vmax.f32 %v540, 0.0
  %v557 = vmax.f32 %v541, 0.0
  %v558 = vmax.f32 %v542, 0.0
  %v559 = vmax.f32 %v543, 0.0
  %v560 = vmax.f32 %v544, 0.0
  %v561 = vmax.f32 %v545, 0.0
  %v562 = vmax.f32 %v546, 0.0
  %v563 = vmax.f32 %v547, 0.0
  %v564 = vmax.f32 %v548, 0.0
  %v565 = vmax.f32 %v549, 0.0
  %v566 = vmax.f32 %v550, 0.0
  %v567 = vmax.f32 %v551, 0.0
  %v568 = vmax.f32 %v552, 0.0
  %v569 = vmax.f32 %v553, 0.0
  %v570 = vpack.c.bf16 %v555, %v554
  %v571 = vpack.c.bf16 %v557, %v556
  %v572 = vpack.c.bf16 %v559, %v558
  %v573 = vpack.c.bf16 %v561, %v560
  %v574 = vpack.c.bf16 %v563, %v562
  %v575 = vpack.c.bf16 %v565, %v564
  %v576 = vpack.c.bf16 %v567, %v566
  %v577 = vpack.c.bf16 %v569, %v568
  %v578 = vld [vmem:[%s7] sm:$0xf]
  %v579 = vld [vmem:[%s7 + $0x4] sm:$0xf]
  %v580 = vld [vmem:[%s7 + $0x8] sm:$0xf]
  %v581 = vld [vmem:[%s7 + $0xc] sm:$0xf]
  %v582 = vld [vmem:[%s7 + $0x10] sm:$0xf]
  %v583 = vld [vmem:[%s7 + $0x14] sm:$0xf]
  %v584 = vld [vmem:[%s7 + $0x18] sm:$0xf]
  %v585 = vld [vmem:[%s7 + $0x1c] sm:$0xf]
  %v586 = vld [vmem:[%s7 + $0x20] sm:$0xf]
  %v587 = vld [vmem:[%s7 + $0x24] sm:$0xf]
  %v588 = vld [vmem:[%s7 + $0x28] sm:$0xf]
  %v589 = vld [vmem:[%s7 + $0x2c] sm:$0xf]
  %v590 = vld [vmem:[%s7 + $0x30] sm:$0xf]
  %v591 = vld [vmem:[%s7 + $0x34] sm:$0xf]
  %v592 = vld [vmem:[%s7 + $0x38] sm:$0xf]
  %v593 = vld [vmem:[%s7 + $0x3c] sm:$0xf]
  %v610 = vunpack.c.l.b16 %v578
  %v611 = vunpack.c.l.b16 %v579
  %v612 = vunpack.c.l.b16 %v580
  %v613 = vunpack.c.l.b16 %v581
  %v614 = vunpack.c.l.b16 %v582
  %v615 = vunpack.c.l.b16 %v583
  %v616 = vunpack.c.l.b16 %v584
  %v617 = vunpack.c.l.b16 %v585
  %v618 = vunpack.c.l.b16 %v586
  %v619 = vunpack.c.l.b16 %v587
  %v620 = vunpack.c.l.b16 %v588
  %v621 = vunpack.c.l.b16 %v589
  %v622 = vunpack.c.l.b16 %v590
  %v623 = vunpack.c.l.b16 %v591
  %v624 = vunpack.c.l.b16 %v592
  %v625 = vunpack.c.l.b16 %v593
  %v626 = vpack.c.b16 %v611, %v610
  %v627 = vpack.c.b16 %v613, %v612
  %v628 = vpack.c.b16 %v615, %v614
  %v629 = vpack.c.b16 %v617, %v616
  %v630 = vpack.c.b16 %v619, %v618
  %v631 = vpack.c.b16 %v621, %v620
  %v632 = vpack.c.b16 %v623, %v622
  %v633 = vpack.c.b16 %v625, %v624
  %642 = vmatpush.bf16.msra.mxu0 %v633
  %643 = vmatpush.bf16.msra.mxu0 %v632
  %644 = vmatpush.bf16.msra.mxu0 %v631
  %645 = vmatpush.bf16.msra.mxu0 %v630
  %646 = vmatpush.bf16.msra.mxu0 %v629
  %647 = vmatpush.bf16.msra.mxu0 %v628
  %648 = vmatpush.bf16.msra.mxu0 %v627
  %649 = vmatpush.bf16.msra.mxu0 %v626
  %650 = vmatmul.bf16.gmra.mxu0 %v570
  %v651 = vpop.f32.mrf.mxu0
  %v652 = vadd.f32 0.0, %v651
  %v653 = vpop.f32.mrf.mxu0
  %v654 = vadd.f32 0.0, %v653
  %655 = vmatmul.bf16.gmra.mxu0 %v571
  %v656 = vpop.f32.mrf.mxu0
  %v657 = vadd.f32 0.0, %v656
  %v658 = vpop.f32.mrf.mxu0
  %v659 = vadd.f32 0.0, %v658
  %660 = vmatmul.bf16.gmra.mxu0 %v572
  %v661 = vpop.f32.mrf.mxu0
  %v662 = vadd.f32 0.0, %v661
  %v663 = vpop.f32.mrf.mxu0
  %v664 = vadd.f32 0.0, %v663
  %665 = vmatmul.bf16.gmra.mxu0 %v573
  %v666 = vpop.f32.mrf.mxu0
  %v667 = vadd.f32 0.0, %v666
  %v668 = vpop.f32.mrf.mxu0
  %v669 = vadd.f32 0.0, %v668
  %670 = vmatmul.bf16.gmra.mxu0 %v574
  %v671 = vpop.f32.mrf.mxu0
  %v672 = vadd.f32 0.0, %v671
  %v673 = vpop.f32.mrf.mxu0
  %v674 = vadd.f32 0.0, %v673
  %675 = vmatmul.bf16.gmra.mxu0 %v575
  %v676 = vpop.f32.mrf.mxu0
  %v677 = vadd.f32 0.0, %v676
  %v678 = vpop.f32.mrf.mxu0
  %v679 = vadd.f32 0.0, %v678
  %680 = vmatmul.bf16.gmra.mxu0 %v576
  %v681 = vpop.f32.mrf.mxu0
  %v682 = vadd.f32 0.0, %v681
  %v683 = vpop.f32.mrf.mxu0
  %v684 = vadd.f32 0.0, %v683
  %685 = vmatmul.bf16.gmra.mxu0 %v577
  %v686 = vpop.f32.mrf.mxu0
  %v687 = vadd.f32 0.0, %v686
  %v688 = vpop.f32.mrf.mxu0
  %v689 = vadd.f32 0.0, %v688
  %690 = vdwg.mxu0
  %v691 = vpack.c.bf16 %v654, %v652
  %v692 = vpack.c.bf16 %v659, %v657
  %v693 = vpack.c.bf16 %v664, %v662
  %v694 = vpack.c.bf16 %v669, %v667
  %v695 = vpack.c.bf16 %v674, %v672
  %v696 = vpack.c.bf16 %v679, %v677
  %v697 = vpack.c.bf16 %v684, %v682
  %v698 = vpack.c.bf16 %v689, %v687
  %v699 = vld [vmem:[%s8] sm:$0x1]
  %v701 = vperm.slane %v699, 0
  %703 = vmatpush.bf16.msra.mxu0 %v698
  %704 = vmatpush.bf16.msra.mxu0 %v697
  %705 = vmatpush.bf16.msra.mxu0 %v696
  %706 = vmatpush.bf16.msra.mxu0 %v695
  %707 = vmatpush.bf16.msra.mxu0 %v694
  %708 = vmatpush.bf16.msra.mxu0 %v693
  %709 = vmatpush.bf16.msra.mxu0 %v692
  %710 = vmatpush.bf16.msra.mxu0 %v691
  %711 = vmatmul.bf16.gmra.mxu0 %v269
  %v712 = vpop.f32.mrf.mxu0
  %v713 = vadd.f32 %v701, %v712
  %v714 = vpop.f32.mrf.mxu0
  %v715 = vadd.f32 %v701, %v714
  %716 = vmatmul.bf16.gmra.mxu0 %v270
  %v717 = vpop.f32.mrf.mxu0
  %v718 = vadd.f32 %v701, %v717
  %v719 = vpop.f32.mrf.mxu0
  %v720 = vadd.f32 %v701, %v719
  %721 = vmatmul.bf16.gmra.mxu0 %v271
  %v722 = vpop.f32.mrf.mxu0
  %v723 = vadd.f32 %v701, %v722
  %v724 = vpop.f32.mrf.mxu0
  %v725 = vadd.f32 %v701, %v724
  %726 = vmatmul.bf16.gmra.mxu0 %v272
  %v727 = vpop.f32.mrf.mxu0
  %v728 = vadd.f32 %v701, %v727
  %v729 = vpop.f32.mrf.mxu0
  %v730 = vadd.f32 %v701, %v729
  %731 = vmatmul.bf16.gmra.mxu0 %v273
  %v732 = vpop.f32.mrf.mxu0
  %v733 = vadd.f32 %v701, %v732
  %v734 = vpop.f32.mrf.mxu0
  %v735 = vadd.f32 %v701, %v734
  %736 = vmatmul.bf16.gmra.mxu0 %v274
  %v737 = vpop.f32.mrf.mxu0
  %v738 = vadd.f32 %v701, %v737
  %v739 = vpop.f32.mrf.mxu0
  %v740 = vadd.f32 %v701, %v739
  %741 = vmatmul.bf16.gmra.mxu0 %v275
  %v742 = vpop.f32.mrf.mxu0
  %v743 = vadd.f32 %v701, %v742
  %v744 = vpop.f32.mrf.mxu0
  %v745 = vadd.f32 %v701, %v744
  %746 = vmatmul.bf16.gmra.mxu0 %v276
  %v747 = vpop.f32.mrf.mxu0
  %v748 = vadd.f32 %v701, %v747
  %v749 = vpop.f32.mrf.mxu0
  %v750 = vadd.f32 %v701, %v749
  %751 = vdwg.mxu0
  %752 = vst [vmem:[%s9] sm:$0xff] %v713
  %753 = vst [vmem:[%s9 + $0x8] sm:$0xff] %v715
  %754 = vst [vmem:[%s9 + $0x10] sm:$0xff] %v718
  %755 = vst [vmem:[%s9 + $0x18] sm:$0xff] %v720
  %756 = vst [vmem:[%s9 + $0x20] sm:$0xff] %v723
  %757 = vst [vmem:[%s9 + $0x28] sm:$0xff] %v725
  %758 = vst [vmem:[%s9 + $0x30] sm:$0xff] %v728
  %759 = vst [vmem:[%s9 + $0x38] sm:$0xff] %v730
  %760 = vst [vmem:[%s9 + $0x40] sm:$0xff] %v733
  %761 = vst [vmem:[%s9 + $0x48] sm:$0xff] %v735
  %762 = vst [vmem:[%s9 + $0x50] sm:$0xff] %v738
  %763 = vst [vmem:[%s9 + $0x58] sm:$0xff] %v740
  %764 = vst [vmem:[%s9 + $0x60] sm:$0xff] %v743
  %765 = vst [vmem:[%s9 + $0x68] sm:$0xff] %v745
  %766 = vst [vmem:[%s9 + $0x70] sm:$0xff] %v748
  %767 = vst [vmem:[%s9 + $0x78] sm:$0xff] %v750
  // Predicated region
  $region38: #{gcnex_forward.1} parent=0 // pred_check
    _
  $region39: #{gcnex_forward.1} parent=0 // pred_check_branch
    %769 = sbr.rel (0) target = $region41
  $region40: #{gcnex_forward.1} parent=0 // pred_region
    _
  $region41: #{gcnex_forward.1} parent=0 // pred_fallthru
    _
  // Predicated region
  $region42: #{gcnex_forward.1} parent=0 // pred_check
    _
  $region43: #{gcnex_forward.1} parent=0 // pred_check_branch
    %771 = sbr.rel (0) target = $region45
  $region44: #{gcnex_forward.1} parent=0 // pred_region
    _
  $region45: #{gcnex_forward.1} parent=0 // pred_fallthru
    _

</llo_original>
